<compile_context>
chip_gen: v7x
topology: tpu7x:2x2x1
jax: 0.10.0
libtpu: 0.0.40
codegen_flags: <defaults>
</compile_context>

<pallas_src>
import functools

import jax
import jax.numpy as jnp
from jax.experimental import pallas as pl
from jax.experimental.pallas import tpu as pltpu


def _round_up(v: int, m: int) -> int:
    return -(-v // m) * m


def _cdiv(a: int, b: int) -> int:
    return -(-a // b)


@functools.lru_cache(maxsize=1)
def _tpu_target():
    """Static (trace-time) description of the TPU generation we compile for."""
    kind = ""
    try:
        kind = jax.devices()[0].device_kind.lower()
    except Exception:
        pass
    vmem_physical = None
    try:
        vmem_physical = int(pltpu.get_tpu_info().vmem_capacity_bytes)
    except Exception:
        pass

    mib = 1024 * 1024
    if "v7" in kind or "tpu7" in kind:
        # 2 TCs, 64 MiB VMEM, ~3.2 TB/s HBM -> mid-size blocks, tight VMEM cap.
        t = dict(name="v7x", num_cores=2, bf16_vpu=True, mxu_reduce=True,
                 target_block_bytes=8 * mib, vmem_budget=36 * mib, vmem_cap=56 * mib)
    elif "v6" in kind:
        t = dict(name="v6e", num_cores=1, bf16_vpu=True, mxu_reduce=False,
                 target_block_bytes=12 * mib, vmem_budget=80 * mib, vmem_cap=100 * mib)
    elif "v5" in kind and not ("lite" in kind or "v5e" in kind):
        # v5p-style megacore chip; no bf16-native VPU assumed.
        t = dict(name="v5p", num_cores=2, bf16_vpu=False, mxu_reduce=False,
                 target_block_bytes=8 * mib, vmem_budget=64 * mib, vmem_cap=100 * mib)
    elif "v5" in kind:
        # v5e: slow HBM, scoped default 16 MiB -> small blocks + explicit limit.
        t = dict(name="v5e", num_cores=1, bf16_vpu=False, mxu_reduce=False,
                 target_block_bytes=4 * mib, vmem_budget=48 * mib, vmem_cap=100 * mib)
    elif "v4" in kind:
        t = dict(name="v4", num_cores=2, bf16_vpu=False, mxu_reduce=False,
                 target_block_bytes=8 * mib, vmem_budget=40 * mib, vmem_cap=64 * mib)
    else:
        t = dict(name="unknown", num_cores=1, bf16_vpu=False, mxu_reduce=False,
                 target_block_bytes=4 * mib, vmem_budget=24 * mib, vmem_cap=64 * mib)

    if vmem_physical:
        t["vmem_cap"] = min(t["vmem_cap"], int(0.85 * vmem_physical))
        t["vmem_budget"] = min(t["vmem_budget"], int(0.6 * vmem_physical))
    return t


def _pow_int(x, n: int):
    """x ** n for small positive integer n via VPU multiplies (exp-by-squaring)."""
    result = None
    base = x
    while n > 0:
        if n & 1:
            result = base if result is None else result * base
        n >>= 1
        if n:
            base = base * base
    return result


def _gem_kernel(x_ref, o_ref, *, p: float, eps: float, hw: int,
                compute_dtype, mxu_reduce: bool):
    # x_ref: (rows_tile, HW); o_ref: (1, rows_tile) lane-dense or (rows_tile, 1).
    x = x_ref[...]
    if x.dtype != compute_dtype:
        x = x.astype(compute_dtype)                 # f32 math on chips w/o bf16 VPU
    x = jnp.maximum(x, jnp.asarray(eps, compute_dtype))  # clamp(min=eps) -> x > 0

    p = float(p)
    if p.is_integer() and 1 <= int(p) <= 16:
        xp = _pow_int(x, int(p))                    # VPU multiplies (p=3 -> x*x*x)
    elif (2.0 * p).is_integer() and 1 <= int(2.0 * p) <= 33:
        n = int(p)                                  # half-integer: x^n * sqrt(x)
        r = jnp.sqrt(x)                             # single EUP transcendental/elem
        xp = r if n == 0 else _pow_int(x, n) * r
    else:
        xf = x.astype(jnp.float32)                  # general p: exp+log on the EUP
        xp = jnp.exp(jnp.float32(p) * jnp.log(xf))

    if mxu_reduce:
        # Row-sum on the otherwise-idle MXU with f32 accumulation (v7x path);
        # avoids a full-tile f32 upcast and keeps the VPU/XLU off the critical path.
        ones = jnp.ones((xp.shape[-1], 1), dtype=xp.dtype)
        s = jnp.dot(xp, ones, preferred_element_type=jnp.float32)[:, 0]
    else:
        s = jnp.sum(xp.astype(jnp.float32), axis=-1)  # XLU lane reduce, f32 accum

    m = s * (1.0 / hw)                              # adaptive_avg_pool2d -> (1, 1)
    y = jnp.exp(jnp.log(m) * (1.0 / p))             # m ** (1/p); m > 0; per-row only

    if o_ref.shape[0] == 1:                         # lane-dense output block
        o_ref[...] = y[None, :].astype(o_ref.dtype)
    else:                                           # sublane fallback (huge H*W)
        o_ref[...] = y[:, None].astype(o_ref.dtype)


def _choose_tiling(rows: int, hw: int, in_itemsize: int, work_bytes_per_elem: int,
                   target_block_bytes: int, vmem_budget_bytes: int, num_cores: int):
    """Pick (rows_tile, lane_dense_output, num_buffers) from real VMEM footprints."""
    padded_hw = _round_up(hw, 128)                  # VMEM pads the lane dim to 128
    in_row_bytes = padded_hw * in_itemsize          # HBM->VMEM bytes per row
    # Per-step working set per row: double-buffered input + in-kernel
    # intermediates (clamp copy, x**p temp, f32 reduce temp) -- not just input.
    foot_row_bytes = padded_hw * (2 * in_itemsize + work_bytes_per_elem)

    budget_rows = max(1, min(target_block_bytes // in_row_bytes,
                             vmem_budget_bytes // foot_row_bytes))

    if rows < 8 or (rows < 128 and rows <= budget_rows):
        # Small: one full-extent block (full-dim blocks are always layout-legal).
        return rows, True, 2

    # Granule 128 keeps the lane-dense (1, rows_tile) output block legal; drop
    # to 8 (sublane output) only if even 128 rows would blow the byte budget.
    granule = 128 if budget_rows >= 128 else 8
    t = max(granule, (min(budget_rows, rows) // granule) * granule)

    # >= 2 steps per TensorCore (v7x: 2 cores -> >= 4 total) so the pipeline
    # actually overlaps DMA with compute on every core, when rows allow it.
    min_steps = 2 * num_cores
    per_step_cap = ((rows // min_steps) // granule) * granule
    if per_step_cap >= granule:
        t = min(t, per_step_cap)

    # Best effort: make the step count a multiple of num_cores so no core is
    # left with an extra (unbalanced) block.
    if num_cores > 1:
        steps = _cdiv(rows, t)
        if steps % num_cores != 0:
            target_steps = _round_up(steps, num_cores)
            t2 = _round_up(max(granule, _cdiv(rows, target_steps)), granule)
            if _cdiv(rows, t2) % num_cores == 0:
                t = t2

    # Deeper input pipelining for long grids, only if the corrected budget allows.
    num_buffers = 2
    if _cdiv(rows, t) >= 4:
        foot3 = t * padded_hw * (3 * in_itemsize + work_bytes_per_elem)
        if foot3 <= vmem_budget_bytes:
            num_buffers = 3

    lane_dense = (t % 128 == 0) or (t == rows)
    return t, lane_dense, num_buffers


def gem_pool(x: jax.Array, p: float = 3.0, eps: float = 1e-6, *,
             mxu_reduce=None) -> jax.Array:
    """GeM pooling. x: (N, C, H, W) -> (N, C, 1, 1). Keeps x's dtype.

    `p` is a static Python float (matches the module default freeze_p=True).
    """
    N, C, H, W = x.shape
    rows, hw = N * C, H * W
    x2d = x.reshape(rows, hw)                       # no dtype upcast in the wrapper

    tgt = _tpu_target()
    in_itemsize = x.dtype.itemsize

    # bf16/fp16 math stays native on bf16-capable VPUs (v6e/v7x); f32 elsewhere.
    packed = in_itemsize < 4 and jnp.issubdtype(x.dtype, jnp.floating)
    compute_dtype = x.dtype if (packed and tgt["bf16_vpu"]) else jnp.float32
    if mxu_reduce is None:
        mxu_reduce = bool(tgt["mxu_reduce"] and compute_dtype != jnp.float32)

    # In-kernel expansion per element (beyond the N-buffered input block).
    if compute_dtype == jnp.float32:
        work_bytes_per_elem = 8 + (4 if packed else 0)   # f32 clamp copy + f32 x**p (+ upcast)
    else:
        cbytes = in_itemsize
        work_bytes_per_elem = 2 * cbytes + (0 if mxu_reduce else 4)  # + f32 reduce temp

    rows_tile, lane_dense, num_buffers = _choose_tiling(
        rows, hw, in_itemsize, work_bytes_per_elem,
        tgt["target_block_bytes"], tgt["vmem_budget"], tgt["num_cores"])

    # Explicit VMEM limit from the real per-step footprint (+ generous slack),
    # capped per generation (v7x: stay well under its 64 MiB physical VMEM).
    padded_hw = _round_up(hw, 128)
    footprint = rows_tile * padded_hw * (num_buffers * in_itemsize + work_bytes_per_elem)
    vmem_limit = int(max(32 << 20, min(tgt["vmem_cap"], 2 * footprint + (8 << 20))))

    grid = (_cdiv(rows, rows_tile),)                # partial last tile handled by Pallas

    if lane_dense:
        out_shape_2d = (1, rows)
        out_spec = pl.BlockSpec((1, rows_tile), lambda i: (0, i))
    else:
        out_shape_2d = (rows, 1)
        out_spec = pl.BlockSpec((rows_tile, 1), lambda i: (i, 0))

    if num_buffers == 2:
        in_spec = pl.BlockSpec((rows_tile, hw), lambda i: (i, 0))
    else:
        in_spec = pl.BlockSpec((rows_tile, hw), lambda i: (i, 0),
                               pipeline_mode=pl.Buffered(num_buffers))

    # Advisory cost hint so XLA schedules around a bandwidth-heavy custom call.
    p_f = float(p)
    if p_f.is_integer() and 1 <= int(p_f) <= 16:
        flops = (int(p_f) + 1) * rows * hw
        transcendentals = 2 * rows
    elif (2.0 * p_f).is_integer():
        flops = (int(p_f) + 2) * rows * hw
        transcendentals = rows * hw + 2 * rows
    else:
        flops = 3 * rows * hw
        transcendentals = 2 * rows * hw + 2 * rows
    cost = pl.CostEstimate(flops=int(flops), transcendentals=int(transcendentals),
                           bytes_accessed=int(rows * hw * in_itemsize + rows * in_itemsize))

    out2d = pl.pallas_call(
        functools.partial(_gem_kernel, p=p_f, eps=float(eps), hw=hw,
                          compute_dtype=compute_dtype, mxu_reduce=bool(mxu_reduce)),
        out_shape=jax.ShapeDtypeStruct(out_shape_2d, x.dtype),
        grid_spec=pltpu.PrefetchScalarGridSpec(
            num_scalar_prefetch=0,
            grid=grid,
            in_specs=[in_spec],
            out_specs=out_spec,
        ),
        compiler_params=pltpu.CompilerParams(
            dimension_semantics=("parallel",),
            vmem_limit_bytes=vmem_limit,
        ),
        cost_estimate=cost,
    )(x2d)

    return out2d.reshape(N, C, 1, 1)


if __name__ == "__main__":
    p, eps = 3.0, 1e-6

    def ref_gem(xf, p, eps):
        return jnp.mean(jnp.maximum(xf, eps) ** p, axis=(2, 3), keepdims=True) ** (1.0 / p)

    # 1) Small f32 shape from the spec (single full-extent block, XLU reduce).
    N, C, H, W = 2, 4, 16, 16
    x = jax.random.normal(jax.random.PRNGKey(0), (N, C, H, W), dtype=jnp.float32)
    y = gem_pool(x, p=p, eps=eps)
    jax.block_until_ready(y)
    assert y.shape == (N, C, 1, 1)
    assert jnp.allclose(y, ref_gem(x, p, eps), rtol=1e-4, atol=1e-5), "f32 mismatch"

    # 2) Same small shape in bf16 with the MXU row-sum forced on, so the v7x
    #    reduce path is validated regardless of which generation this runs on.
    xb = x.astype(jnp.bfloat16)
    yb = gem_pool(xb, p=p, eps=eps, mxu_reduce=True)
    jax.block_until_ready(yb)
    assert jnp.allclose(yb.astype(jnp.float32),
                        ref_gem(xb.astype(jnp.float32), p, eps),
                        rtol=2e-2, atol=2e-2), "bf16 MXU-reduce mismatch"

    # 3) bf16 mid-size case: byte-budgeted tiling, >= 2 steps per core, and the
    #    lane-dense output path (rows = 2048, hw = 49).
    N2, C2, H2, W2 = 4, 512, 7, 7
    x2 = jax.random.normal(jax.random.PRNGKey(1), (N2, C2, H2, W2), dtype=jnp.bfloat16)
    y2 = gem_pool(x2, p=p, eps=eps)
    jax.block_until_ready(y2)
    assert y2.shape == (N2, C2, 1, 1)
    assert jnp.allclose(y2.astype(jnp.float32),
                        ref_gem(x2.astype(jnp.float32), p, eps),
                        rtol=2e-2, atol=2e-2), "bf16 mismatch"

    # 4) f32 large-spatial case: long grid, exercises Buffered(3) input
    #    pipelining plus the explicit vmem_limit (rows = 4096, hw = 3136).
    N3, C3, H3, W3 = 8, 512, 56, 56
    x3 = jax.random.normal(jax.random.PRNGKey(2), (N3, C3, H3, W3), dtype=jnp.float32)
    y3 = gem_pool(x3, p=p, eps=eps)
    jax.block_until_ready(y3)
    assert y3.shape == (N3, C3, 1, 1)
    assert jnp.allclose(y3, ref_gem(x3, p, eps), rtol=1e-4, atol=1e-5), "large f32 mismatch"

    print("KERNEL_OK")
</pallas_src>

<mosaic_0001>
module attributes {stable_mosaic.version = 11 : i64} {
  func.func @_gem_kernel(%arg0: i32, %arg1: memref<8x256xf32, #tpu.memory_space<vmem>>, %arg2: memref<1x8xf32, #tpu.memory_space<vmem>>) attributes {dimension_semantics = [#tpu.dimension_semantics<parallel>], iteration_bounds = array<i64: 1>, scalar_prefetch = 0 : i64, scratch_operands = 0 : i64, tpu.core_type = #tpu.core_type<tc>, window_params = [{transform_indices = @transform_0, window_bounds = array<i64: 8, 256>}, {transform_indices = @transform_1, window_bounds = array<i64: 1, 8>}]} {
    %c0 = arith.constant 0 : index
    %c0_0 = arith.constant 0 : index
    %0 = vector.load %arg1[%c0, %c0_0] : memref<8x256xf32, #tpu.memory_space<vmem>>, vector<8x256xf32>
    %cst = arith.constant 9.99999997E-7 : f32
    %1 = vector.broadcast %cst : f32 to vector<8x256xf32>
    %2 = arith.maximumf %0, %1 : vector<8x256xf32>
    %3 = arith.mulf %2, %2 : vector<8x256xf32>
    %4 = arith.mulf %2, %3 : vector<8x256xf32>
    %cst_1 = arith.constant dense<0.000000e+00> : vector<8xf32>
    %5 = vector.multi_reduction <add>, %4, %cst_1 [1] : vector<8x256xf32> to vector<8xf32>
    %cst_2 = arith.constant 3.906250e-03 : f32
    %6 = vector.broadcast %cst_2 : f32 to vector<8xf32>
    %7 = arith.mulf %5, %6 : vector<8xf32>
    %8 = math.log %7 : vector<8xf32>
    %cst_3 = arith.constant 0.333333343 : f32
    %9 = vector.broadcast %cst_3 : f32 to vector<8xf32>
    %10 = arith.mulf %8, %9 : vector<8xf32>
    %11 = math.exp %10 : vector<8xf32>
    %12 = vector.shape_cast %11 : vector<8xf32> to vector<1x8xf32>
    %c0_4 = arith.constant 0 : index
    %c0_5 = arith.constant 0 : index
    %13 = vector.load %arg2[%c0_4, %c0_5] : memref<1x8xf32, #tpu.memory_space<vmem>>, vector<1x8xf32>
    tpu.vector_store %arg2[%c0_4, %c0_5], %12 {strides = array<i32>} : memref<1x8xf32, #tpu.memory_space<vmem>>, vector<1x8xf32>,
    return
  }
  func.func @transform_0(%arg0: i32) -> (i32, i32) {
    %c0_i32 = arith.constant 0 : i32
    %c0_i32_0 = arith.constant 0 : i32
    return %arg0, %c0_i32 : i32, i32
  }
  func.func @transform_1(%arg0: i32) -> (i32, i32) {
    %c0_i32 = arith.constant 0 : i32
    %c0_i32_0 = arith.constant 0 : i32
    return %c0_i32, %arg0 : i32, i32
  }
}

</mosaic_0001>

<llo_original>
// kernel: tpu_custom_call.1
$region0: #{tpu_custom_call.1}
  #allocation0 [shape = 'u32[]', space=smem, size = 0x4, offset = 0x4, fixed_abs, tag = 'smem constant byte address 0x4 - core index']
  #allocation1 [shape = 'u32[144,128]{1,0:T(1,128)}', space=vmem, size = 0x12000, scoped, tag = 'internal scratch']
  %s0 = inlined_call_operand.hbm [shape: f32[8,256], index: 0, kind: input, shape index: {}]
  %s1 = inlined_call_operand.hbm [shape: f32[1,8], index: 1, kind: output, shape index: {}]
  %s2 = sld [smem:[#allocation0]]
  $region18: #{tpu_custom_call.1} parent=0
    _
  %s4 = ssub.s32 1, %s2
  %s5 = scalar_select 0, %s4, %s2
  $region1: #{tpu_custom_call.1} parent=0
    #allocation2 [shape = 'u8[8192]{0}', space=vmem, size = 0x2000, scoped, tag = 'input window, operand 0, single buffered']
    #allocation3 [shape = 's32[1]{0}', space=sflag, size = 0x4, scoped, tag = 'scoped memory for tpu_custom_call.1']
    #allocation4 [shape = 's32[1]{0}', space=sflag, size = 0x4, scoped, tag = 'scoped memory for tpu_custom_call.1']
    #allocation5 [shape = 'u8[512]{0}', space=vmem, size = 0x400, scoped, tag = 'output window, operand 0, single buffered']
    %6 = vsyncpa [#allocation3], 0
    %7 = vsyncpa [#allocation4], 0
    // Predicated region
    $region2: #{tpu_custom_call.1} parent=1 // pred_check
      _
    $region3: #{tpu_custom_call.1} parent=1 // pred_check_branch
      %9 = sbr.rel (0) target = $region5
    $region4: #{tpu_custom_call.1} parent=1 // pred_region
      %s11 = ssub.s32 256, 256
      %12 = vsyncadd [#allocation3], %s11
      %s14 = sshll.u32 [#allocation2], 4
      %s15 = int_to_ptr.vmem [resolvable:$true] %s14
      %17 = dma.hbm_to_vmem [thread:$0]  %s0, 256, %s15, [#allocation3]
    $region5: #{tpu_custom_call.1} parent=1 // pred_fallthru
      _
    // Predicated region
    $region6: #{tpu_custom_call.1} parent=1 // pred_check
      _
    $region7: #{tpu_custom_call.1} parent=1 // pred_check_branch
      %19 = sbr.rel (0) target = $region9
    $region8: #{tpu_custom_call.1} parent=1 // pred_region
      %20 = dma.done [#allocation3], 256
    $region9: #{tpu_custom_call.1} parent=1 // pred_fallthru
      _
    %v21 = vld [vmem:[#allocation2] sm:$0xff]
    %v22 = vld [vmem:[#allocation2 + $0x8] sm:$0xff]
    %v23 = vmax.f32 %v21, 1e-06
    %v24 = vmax.f32 %v22, 1e-06
    %v25 = vmul.f32 %v23, %v23
    %v26 = vmul.f32 %v24, %v24
    %v27 = vmul.f32 %v23, %v25
    %v28 = vmul.f32 %v24, %v26
    %v29 = vadd.f32 %v27, %v28
    %30 = vadd.xlane.f32.xlu0 %v29
    %v31 = vpop.xlane.xlu0 %30
    %v32 = vmul.f32 %v31, 0.00390625
    %v33 = vlog2.pop %v32
    %v34 = vmul.f32 %v33, 0.6931472
    %v35 = vmul.f32 %v34, 0.33333334
    %v36 = vmul.f32 %v35, 1.442695
    %v37 = vpow.pop %v36
    %v39 = vlaneseq
    %v40 = vand.u32 %v39, 127
    %v41 = vlaneseq
    %v42 = vshrl.u32 %v41, 7
    %v43 = vsub.s32 %v40, %v42
    %v44 = vrot.slane %v37, %v43
    %vm46 = vcmask 57344
    %47 = vst.msk [vmem:[#allocation5] sm:$0x1] %vm46, %v44
    // Predicated region
    $region10: #{tpu_custom_call.1} parent=1 // pred_check
      _
    $region11: #{tpu_custom_call.1} parent=1 // pred_check_branch
      %49 = sbr.rel (0) target = $region13
    $region12: #{tpu_custom_call.1} parent=1 // pred_region
      %s51 = ssub.s32 16, 16
      %52 = vsyncadd [#allocation4], %s51
      %s54 = sshll.u32 [#allocation5], 4
      %s55 = int_to_ptr.vmem [resolvable:$true] %s54
      %57 = dma.vmem_to_hbm [thread:$0]  %s55, 16, %s1, [#allocation4]
    $region13: #{tpu_custom_call.1} parent=1 // pred_fallthru
      _
    // Predicated region
    $region14: #{tpu_custom_call.1} parent=1 // pred_check
      _
    $region15: #{tpu_custom_call.1} parent=1 // pred_check_branch
      %59 = sbr.rel (0) target = $region17
    $region16: #{tpu_custom_call.1} parent=1 // pred_region
      %60 = dma.done [#allocation4], 16
    $region17: #{tpu_custom_call.1} parent=1 // pred_fallthru
      _
    %61 = vsyncpa [#allocation3], 1
    %62 = vsyncpa [#allocation4], 1

</llo_original>
